<compile_context>
chip_gen: v5e
topology: v5e:2x2
jax: 0.10.0
libtpu: 0.0.40
codegen_flags: <defaults>
</compile_context>

<pallas_src>
import jax
import jax.numpy as jnp
from jax.experimental import pallas as pl
from jax.experimental.pallas import tpu as pltpu

IN_FEATURES = 256
OUT_FEATURES = 256

# Number of row-blocks along M. 2 engages both TensorCores on v7x; on
# single-TC chips (v5e/v6e) the extra grid step is ~0.35 us and buys a little
# DMA/compute overlap, so it is safe everywhere.
NUM_BLOCKS = 2

# y = x @ W^T : contract last dim of x with last dim of W (torch Linear layout).
DIMENSION_NUMBERS = (((1,), (1,)), ((), ()))


def linear_kernel(x_ref, w_ref, b_ref, o_ref):
    # x_ref: (tm, K), w_ref: (N, K)  [NOT pre-transposed], b_ref: (1, N), o_ref: (tm, N)
    acc = jax.lax.dot_general(
        x_ref[...],
        w_ref[...],
        dimension_numbers=DIMENSION_NUMBERS,
        preferred_element_type=jnp.float32,
        precision=jax.lax.Precision.DEFAULT,  # deliberate: match the reference pass count
    )
    o_ref[...] = (acc + b_ref[...]).astype(o_ref.dtype)


def linear_pallas(x, weight, bias):
    """x: (B, S, H_in), weight: (H_out, H_in), bias: (H_out,) -> (B, S, H_out)."""
    B, S, H_in = x.shape
    H_out = weight.shape[0]
    M = B * S

    x2d = x.reshape(M, H_in)
    b2d = bias.reshape(1, H_out)

    # Pad rows so each of the NUM_BLOCKS row-tiles is a sublane multiple (8).
    row_align = 8 * NUM_BLOCKS
    M_pad = ((M + row_align - 1) // row_align) * row_align
    if M_pad != M:
        x2d = jnp.pad(x2d, ((0, M_pad - M), (0, 0)))
    tm = M_pad // NUM_BLOCKS

    itemsize = jnp.dtype(x.dtype).itemsize
    cost = pl.CostEstimate(
        flops=2 * M_pad * H_in * H_out,
        bytes_accessed=(M_pad * H_in + H_in * H_out + M_pad * H_out + H_out) * itemsize,
        transcendentals=0,
    )

    out2d = pl.pallas_call(
        linear_kernel,
        out_shape=jax.ShapeDtypeStruct((M_pad, H_out), x.dtype),
        grid=(NUM_BLOCKS,),
        in_specs=[
            pl.BlockSpec((tm, H_in), lambda i: (i, 0)),      # x tile per grid step
            pl.BlockSpec((H_out, H_in), lambda i: (0, 0)),   # weight resident (fetched once)
            pl.BlockSpec((1, H_out), lambda i: (0, 0)),      # bias resident
        ],
        out_specs=pl.BlockSpec((tm, H_out), lambda i: (i, 0)),
        cost_estimate=cost,
        compiler_params=pltpu.CompilerParams(
            dimension_semantics=("parallel",),               # megacore sharding on v7x
        ),
    )(x2d, weight, b2d)

    if M_pad != M:
        out2d = out2d[:M]
    return out2d.reshape(B, S, H_out)


if __name__ == "__main__":
    key = jax.random.PRNGKey(0)
    kx, kw, kb = jax.random.split(key, 3)

    # Module-implied shapes: x355 = (1, 384, 256), Linear(256 -> 256, bias=True)
    x = jax.random.normal(kx, (1, 384, IN_FEATURES), dtype=jnp.float32)
    # Deterministic synthetic parameters (not a checkpoint load)
    weight = jax.random.normal(kw, (OUT_FEATURES, IN_FEATURES), dtype=jnp.float32) * 0.02
    bias = jax.random.normal(kb, (OUT_FEATURES,), dtype=jnp.float32) * 0.02

    out = linear_pallas(x, weight, bias)
    out = jax.block_until_ready(out)

    # Reference: identical contraction/precision outside Pallas (torch.nn.Linear semantics)
    ref2d = jax.lax.dot_general(
        x.reshape(-1, IN_FEATURES),
        weight,
        dimension_numbers=DIMENSION_NUMBERS,
        preferred_element_type=jnp.float32,
        precision=jax.lax.Precision.DEFAULT,
    ) + bias
    ref = ref2d.reshape(1, 384, OUT_FEATURES)

    assert out.shape == (1, 384, OUT_FEATURES)
    assert jnp.allclose(out, ref, atol=1e-4, rtol=1e-4)

    print("KERNEL_OK")
</pallas_src>

<mosaic_0001>
module attributes {stable_mosaic.version = 11 : i64} {
  func.func @linear_kernel(%arg0: i32, %arg1: memref<192x256xf32, #tpu.memory_space<vmem>>, %arg2: memref<256x256xf32, #tpu.memory_space<vmem>>, %arg3: memref<1x256xf32, #tpu.memory_space<vmem>>, %arg4: memref<192x256xf32, #tpu.memory_space<vmem>>) attributes {dimension_semantics = [#tpu.dimension_semantics<parallel>], iteration_bounds = array<i64: 2>, scalar_prefetch = 0 : i64, scratch_operands = 0 : i64, tpu.core_type = #tpu.core_type<tc>, window_params = [{transform_indices = @transform_0, window_bounds = array<i64: 192, 256>}, {pipeline_mode = #tpu.pipeline_mode<synchronous>, transform_indices = @transform_1, window_bounds = array<i64: 256, 256>}, {pipeline_mode = #tpu.pipeline_mode<synchronous>, transform_indices = @transform_2, window_bounds = array<i64: 1, 256>}, {transform_indices = @transform_3, window_bounds = array<i64: 192, 256>}]} {
    %c0 = arith.constant 0 : index
    %c0_0 = arith.constant 0 : index
    %0 = vector.load %arg1[%c0, %c0_0] : memref<192x256xf32, #tpu.memory_space<vmem>>, vector<192x256xf32>
    %c0_1 = arith.constant 0 : index
    %c0_2 = arith.constant 0 : index
    %1 = vector.load %arg2[%c0_1, %c0_2] : memref<256x256xf32, #tpu.memory_space<vmem>>, vector<256x256xf32>
    %cst = arith.constant dense<0.000000e+00> : vector<192x256xf32>
    %2 = tpu.matmul %0, %1, %cst {dimension_numbers = #tpu.dot_dimension_numbers<[1], [1], [0], [0], [0, 0, 1, 0], [], []>} : vector<192x256xf32>, vector<256x256xf32>, vector<192x256xf32> -> vector<192x256xf32>
    %c0_3 = arith.constant 0 : index
    %c0_4 = arith.constant 0 : index
    %3 = vector.load %arg3[%c0_3, %c0_4] : memref<1x256xf32, #tpu.memory_space<vmem>>, vector<1x256xf32>
    %4 = vector.broadcast %3 : vector<1x256xf32> to vector<192x256xf32>
    %5 = arith.addf %2, %4 : vector<192x256xf32>
    %c0_5 = arith.constant 0 : index
    %c0_6 = arith.constant 0 : index
    %6 = vector.load %arg4[%c0_5, %c0_6] : memref<192x256xf32, #tpu.memory_space<vmem>>, vector<192x256xf32>
    tpu.vector_store %arg4[%c0_5, %c0_6], %5 {strides = array<i32>} : memref<192x256xf32, #tpu.memory_space<vmem>>, vector<192x256xf32>,
    return
  }
  func.func @transform_0(%arg0: i32) -> (i32, i32) {
    %c0_i32 = arith.constant 0 : i32
    %c0_i32_0 = arith.constant 0 : i32
    return %arg0, %c0_i32 : i32, i32
  }
  func.func @transform_1(%arg0: i32) -> (i32, i32) {
    %c0_i32 = arith.constant 0 : i32
    %c0_i32_0 = arith.constant 0 : i32
    %c0_i32_1 = arith.constant 0 : i32
    return %c0_i32, %c0_i32_0 : i32, i32
  }
  func.func @transform_2(%arg0: i32) -> (i32, i32) {
    %c0_i32 = arith.constant 0 : i32
    %c0_i32_0 = arith.constant 0 : i32
    %c0_i32_1 = arith.constant 0 : i32
    return %c0_i32, %c0_i32_0 : i32, i32
  }
  func.func @transform_3(%arg0: i32) -> (i32, i32) {
    %c0_i32 = arith.constant 0 : i32
    %c0_i32_0 = arith.constant 0 : i32
    return %arg0, %c0_i32 : i32, i32
  }
}

</mosaic_0001>

<llo_original>
// kernel: tpu_custom_call.1
$region0: #{tpu_custom_call.1}
  #allocation0 [shape = 'u32[]', space=smem, size = 0x4, offset = 0x4, fixed_abs, tag = 'smem constant byte address 0x4 - core index']
  #allocation1 [shape = 'u32[72,128]{1,0:T(1,128)}', space=vmem, size = 0x9000, scoped, tag = 'internal scratch']
  %s0 = inlined_call_operand.hbm [shape: f32[384,256], index: 0, kind: input, shape index: {}]
  %s1 = inlined_call_operand.hbm [shape: f32[256,256], index: 1, kind: input, shape index: {}]
  %s2 = inlined_call_operand.hbm [shape: f32[1,256], index: 2, kind: input, shape index: {}]
  %s3 = inlined_call_operand.hbm [shape: f32[384,256], index: 3, kind: output, shape index: {}]
  %s4 = sld [smem:[#allocation0]]
  $region57: #{tpu_custom_call.1} parent=0
    _
  %s6 = ssub.s32 1, %s4
  %s7 = scalar_select 0, %s6, %s4
  $region1: #{tpu_custom_call.1} parent=0
    #allocation2 [shape = 'u8[393216]{0}', space=vmem, size = 0x60000, scoped, tag = 'input window, operand 0']
    #allocation3 [shape = 's32[2]{0}', space=sflag, size = 0x8, scoped, tag = 'scoped memory for tpu_custom_call.1']
    #allocation4 [shape = 's32[2]{0}', space=sflag, size = 0x8, scoped, tag = 'scoped memory for tpu_custom_call.1']
    #allocation5 [shape = 'u8[262144]{0}', space=vmem, size = 0x40000, scoped, tag = 'input window, operand 1, single buffered']
    #allocation6 [shape = 's32[1]{0}', space=sflag, size = 0x4, scoped, tag = 'scoped memory for tpu_custom_call.1']
    #allocation7 [shape = 'u8[1024]{0}', space=vmem, size = 0x400, scoped, tag = 'input window, operand 2, single buffered']
    #allocation8 [shape = 'u8[393216]{0}', space=vmem, size = 0x60000, scoped, tag = 'output window, operand 0']
    %8 = vsyncpa [#allocation3], 0
    %s9 = scalar_lea.sflag [#allocation3], 1
    %10 = vsyncpa %s9, 0
    %11 = vsyncpa [#allocation6], 0
    %12 = vsyncpa [#allocation4], 0
    %s13 = scalar_lea.sflag [#allocation4], 1
    %14 = vsyncpa %s13, 0
    loop: start=0, step=1, limit=4
    $region2: #{tpu_custom_call.1} parent=1 // loop_pre_header
      _
    $region3: #{tpu_custom_call.1} parent=1 // loop_header
      %s16 = sphi 0, %s20
      %p17 = scmp.ge.s32.totalorder %s16, 4
      %s26 = sphi 0, %s28
      %s29 = sphi 0, %s26
      %s30 = sphi 0, %s29
      %s46 = sphi 0, %s30
      %s50 = sphi 0, %s50
      %s52 = sphi 0, %s50
      %s53 = sphi 0, %s52
      %s67 = sphi 0, %s53
      %s71 = sphi 0, %s71
      %s73 = sphi 0, %s71
      %s74 = sphi 0, %s73
      %s88 = sphi 0, %s74
      %s94 = sphi 0, %s96
      %s97 = sphi 0, %s94
      %s98 = sphi 0, %s97
      %s114 = sphi 0, %s98
    $region4: #{tpu_custom_call.1} parent=1 // loop_header_branch
      %19 = sbr.rel (%p17) target = $region8
    $region5: #{tpu_custom_call.1} parent=1 // loop_body
      %s21 = ssub.s32 %s16, 1
      %s22 = ssub.s32 %s16, 2
      %s23 = sadd.s32 %s16, 1
      %s24 = ssub.s32 %s16, %s23
      %p25 = scmp.eq.s32.totalorder %s24, 0
      %s27 = sadd.s32 %s26, 1
      %s28 = scalar_select %p25, %s26, %s27
      %p31 = pneg %p25
      %p32 = scmp.eq.s32.totalorder %s16, 1
      %p33 = por %p31, %p32
      %p34 = scmp.ne.s32.totalorder %s26, %s29
      %p35 = scmp.eq.s32.totalorder %s16, 0
      %p36 = por %p34, %p35
      %p37 = scmp.ne.s32.totalorder %s26, %s29
      %p38 = scmp.eq.s32.totalorder %s21, 1
      %p39 = por %p37, %p38
      %p40 = scmp.ne.s32.totalorder %s29, %s30
      %p41 = scmp.eq.s32.totalorder %s21, 0
      %p42 = por %p40, %p41
      %p43 = scmp.ne.s32.totalorder %s29, %s30
      %p44 = scmp.eq.s32.totalorder %s22, 1
      %p45 = por %p43, %p44
      %p47 = scmp.ne.s32.totalorder %s30, %s46
      %p48 = scmp.eq.s32.totalorder %s22, 0
      %p49 = por %p47, %p48
      %s51 = sadd.s32 %s50, 1
      %p54 = scmp.eq.s32.totalorder %s16, 1
      %p55 = scmp.ne.s32.totalorder %s50, %s52
      %p56 = scmp.eq.s32.totalorder %s16, 0
      %p57 = por %p55, %p56
      %p58 = scmp.ne.s32.totalorder %s50, %s52
      %p59 = scmp.eq.s32.totalorder %s21, 1
      %p60 = por %p58, %p59
      %p61 = scmp.ne.s32.totalorder %s52, %s53
      %p62 = scmp.eq.s32.totalorder %s21, 0
      %p63 = por %p61, %p62
      %p64 = scmp.ne.s32.totalorder %s52, %s53
      %p65 = scmp.eq.s32.totalorder %s22, 1
      %p66 = por %p64, %p65
      %p68 = scmp.ne.s32.totalorder %s53, %s67
      %p69 = scmp.eq.s32.totalorder %s22, 0
      %p70 = por %p68, %p69
      %s72 = sadd.s32 %s71, 1
      %p75 = scmp.eq.s32.totalorder %s16, 1
      %p76 = scmp.ne.s32.totalorder %s71, %s73
      %p77 = scmp.eq.s32.totalorder %s16, 0
      %p78 = por %p76, %p77
      %p79 = scmp.ne.s32.totalorder %s71, %s73
      %p80 = scmp.eq.s32.totalorder %s21, 1
      %p81 = por %p79, %p80
      %p82 = scmp.ne.s32.totalorder %s73, %s74
      %p83 = scmp.eq.s32.totalorder %s21, 0
      %p84 = por %p82, %p83
      %p85 = scmp.ne.s32.totalorder %s73, %s74
      %p86 = scmp.eq.s32.totalorder %s22, 1
      %p87 = por %p85, %p86
      %p89 = scmp.ne.s32.totalorder %s74, %s88
      %p90 = scmp.eq.s32.totalorder %s22, 0
      %p91 = por %p89, %p90
      %s92 = ssub.s32 %s16, %s23
      %p93 = scmp.eq.s32.totalorder %s92, 0
      %s95 = sadd.s32 %s94, 1
      %s96 = scalar_select %p93, %s94, %s95
      %p99 = pneg %p93
      %p100 = scmp.eq.s32.totalorder %s16, 1
      %p101 = por %p99, %p100
      %p102 = scmp.ne.s32.totalorder %s94, %s97
      %p103 = scmp.eq.s32.totalorder %s16, 0
      %p104 = por %p102, %p103
      %p105 = scmp.ne.s32.totalorder %s94, %s97
      %p106 = scmp.eq.s32.totalorder %s21, 1
      %p107 = por %p105, %p106
      %p108 = scmp.ne.s32.totalorder %s97, %s98
      %p109 = scmp.eq.s32.totalorder %s21, 0
      %p110 = por %p108, %p109
      %p111 = scmp.ne.s32.totalorder %s97, %s98
      %p112 = scmp.eq.s32.totalorder %s22, 1
      %p113 = por %p111, %p112
      %p115 = scmp.ne.s32.totalorder %s98, %s114
      %p116 = scmp.eq.s32.totalorder %s22, 0
      %p117 = por %p115, %p116
      %p118 = scmp.le.s32.totalorder 1, %s16
      %p119 = scmp.lt.s32.totalorder %s16, 3
      %p120 = pnand %p118, %p119
      %p121 = pneg %p120
      // Predicated region
      $region9: #{tpu_custom_call.1} parent=5 // pred_check
        _
      $region10: #{tpu_custom_call.1} parent=5 // pred_check_branch
        %123 = sbr.rel (%p120) target = $region12
      $region11: #{tpu_custom_call.1} parent=5 // pred_region
        %s124 = ssub.s32 %s16, 1
        // Predicated region
        $region13: #{tpu_custom_call.1} parent=11 // pred_check
          %p125 = pneg %p63
        $region14: #{tpu_custom_call.1} parent=11 // pred_check_branch
          %127 = sbr.rel (%p125) target = $region16
        $region15: #{tpu_custom_call.1} parent=11 // pred_region
          %129 = vsyncadd [#allocation6], 0
          %s130 = sshll.u32 %s1, 4
          %s131 = int_to_ptr.hbm [resolvable:$true] %s130
          %s132 = sshll.u32 [#allocation5], 4
          %s133 = int_to_ptr.vmem [resolvable:$true] %s132
          %138 = dma.hbm_to_vmem [thread:$0]  %s131, 8192, %s133, [#allocation6], 256, 256, 16
        $region16: #{tpu_custom_call.1} parent=11 // pred_fallthru
          _
        // Predicated region
        $region17: #{tpu_custom_call.1} parent=11 // pred_check
          %p139 = pneg %p84
        $region18: #{tpu_custom_call.1} parent=11 // pred_check_branch
          %141 = sbr.rel (%p139) target = $region20
        $region19: #{tpu_custom_call.1} parent=11 // pred_region
          %143 = vsyncadd [#allocation6], 0
          %s145 = sshll.u32 %s2, 4
          %s146 = int_to_ptr.hbm [resolvable:$true] %s145
          %s147 = sshll.u32 [#allocation7], 4
          %s148 = int_to_ptr.vmem [resolvable:$true] %s147
          %150 = dma.hbm_to_vmem [thread:$0]  %s146, 32, %s148, [#allocation6]
        $region20: #{tpu_custom_call.1} parent=11 // pred_fallthru
          _
      $region12: #{tpu_custom_call.1} parent=5 // pred_fallthru
        _
      %p151 = scmp.lt.s32.totalorder %s16, 2
      // Predicated region
      $region21: #{tpu_custom_call.1} parent=5 // pred_check
        %p152 = pneg %p151
      $region22: #{tpu_custom_call.1} parent=5 // pred_check_branch
        %154 = sbr.rel (%p152) target = $region24
      $region23: #{tpu_custom_call.1} parent=5 // pred_region
        // Predicated region
        $region25: #{tpu_custom_call.1} parent=23 // pred_check
          %p155 = pneg %p36
        $region26: #{tpu_custom_call.1} parent=23 // pred_check_branch
          %157 = sbr.rel (%p155) target = $region28
        $region27: #{tpu_custom_call.1} parent=23 // pred_region
          %s158 = sand.u32 %s26, 1
          %s159 = scalar_lea.sflag [#allocation3], %s158
          %s160 = sand.u32 %s26, 1
          %s161 = smul.addr %s160, 384
          %s162 = scalar_lea.vmem [#allocation2], %s161
          %s163 = smul.u32 24, %s16
          %165 = vsyncadd %s159, 0
          %s166 = smul.addr %s163, 2
          %s167 = smul.addr %s166, 8
          %s168 = scalar_lea.hbm %s0, %s167
          %s169 = sshll.u32 %s168, 4
          %s170 = int_to_ptr.hbm [resolvable:$true] %s169
          %s171 = sshll.u32 %s162, 4
          %s172 = int_to_ptr.vmem [resolvable:$true] %s171
          %177 = dma.hbm_to_vmem [thread:$0]  %s170, 6144, %s172, %s159, 256, 256, 16
        $region28: #{tpu_custom_call.1} parent=23 // pred_fallthru
          _
      $region24: #{tpu_custom_call.1} parent=5 // pred_fallthru
        _
      %p178 = scmp.le.s32.totalorder 1, %s16
      %p179 = scmp.lt.s32.totalorder %s16, 3
      %p180 = pnand %p178, %p179
      %p181 = pneg %p180
      // Predicated region
      $region29: #{tpu_custom_call.1} parent=5 // pred_check
        _
      $region30: #{tpu_custom_call.1} parent=5 // pred_check_branch
        %183 = sbr.rel (%p180) target = $region32
      $region31: #{tpu_custom_call.1} parent=5 // pred_region
        %s184 = ssub.s32 %s16, 1
        %s185 = sand.u32 %s29, 1
        %s186 = scalar_lea.sflag [#allocation3], %s185
        %s187 = sand.u32 %s29, 1
        %s188 = smul.addr %s187, 384
        %s189 = scalar_lea.vmem [#allocation2], %s188
        // Predicated region
        $region33: #{tpu_custom_call.1} parent=31 // pred_check
          %p190 = pneg %p42
        $region34: #{tpu_custom_call.1} parent=31 // pred_check_branch
          %192 = sbr.rel (%p190) target = $region36
        $region35: #{tpu_custom_call.1} parent=31 // pred_region
          %194 = dma.done %s186, 6144
        $region36: #{tpu_custom_call.1} parent=31 // pred_fallthru
          _
        // Predicated region
        $region37: #{tpu_custom_call.1} parent=31 // pred_check
          %p195 = pneg %p63
        $region38: #{tpu_custom_call.1} parent=31 // pred_check_branch
          %197 = sbr.rel (%p195) target = $region40
        $region39: #{tpu_custom_call.1} parent=31 // pred_region
          %199 = dma.done [#allocation6], 8192
        $region40: #{tpu_custom_call.1} parent=31 // pred_fallthru
          _
        // Predicated region
        $region41: #{tpu_custom_call.1} parent=31 // pred_check
          %p200 = pneg %p84
        $region42: #{tpu_custom_call.1} parent=31 // pred_check_branch
          %202 = sbr.rel (%p200) target = $region44
        $region43: #{tpu_custom_call.1} parent=31 // pred_region
          %204 = dma.done [#allocation6], 32
        $region44: #{tpu_custom_call.1} parent=31 // pred_fallthru
          _
        %s205 = sand.u32 %s29, 1
        %s206 = scalar_lea.sflag [#allocation3], %s205
        %s207 = sand.u32 %s29, 1
        %s208 = smul.addr %s207, 384
        %s209 = scalar_lea.vmem [#allocation2], %s208
        %p210 = pneg %p42
        %p211 = pneg %p39
        %p212 = pneg %p63
        %p213 = pneg %p60
        %p214 = pneg %p84
        %p215 = pneg %p81
        %p216 = pneg %p110
        %p217 = pneg %p107
        %s218 = sand.u32 %s97, 1
        %s219 = scalar_lea.sflag [#allocation4], %s218
        %s220 = sand.u32 %s97, 1
        %s221 = smul.addr %s220, 384
        %s222 = scalar_lea.vmem [#allocation8], %s221
        %s223 = smul.u32 24, %s21
        %s224 = smul.u32 24, %s21
        %v225 = vld [vmem:[%s189] sm:$0xff]
        %v226 = vld [vmem:[%s189 + $0x8] sm:$0xff]
        %v227 = vld [vmem:[%s189 + $0x10] sm:$0xff]
        %v228 = vld [vmem:[%s189 + $0x18] sm:$0xff]
        %v229 = vld [vmem:[%s189 + $0x20] sm:$0xff]
        %v230 = vld [vmem:[%s189 + $0x28] sm:$0xff]
        %v231 = vld [vmem:[%s189 + $0x30] sm:$0xff]
        %v232 = vld [vmem:[%s189 + $0x38] sm:$0xff]
        %v233 = vld [vmem:[%s189 + $0x40] sm:$0xff]
        %v234 = vld [vmem:[%s189 + $0x48] sm:$0xff]
        %v235 = vld [vmem:[%s189 + $0x50] sm:$0xff]
        %v236 = vld [vmem:[%s189 + $0x58] sm:$0xff]
        %v237 = vld [vmem:[%s189 + $0x60] sm:$0xff]
        %v238 = vld [vmem:[%s189 + $0x68] sm:$0xff]
        %v239 = vld [vmem:[%s189 + $0x70] sm:$0xff]
        %v240 = vld [vmem:[%s189 + $0x78] sm:$0xff]
        %v241 = vld [vmem:[%s189 + $0x80] sm:$0xff]
        %v242 = vld [vmem:[%s189 + $0x88] sm:$0xff]
        %v243 = vld [vmem:[%s189 + $0x90] sm:$0xff]
        %v244 = vld [vmem:[%s189 + $0x98] sm:$0xff]
        %v245 = vld [vmem:[%s189 + $0xa0] sm:$0xff]
        %v246 = vld [vmem:[%s189 + $0xa8] sm:$0xff]
        %v247 = vld [vmem:[%s189 + $0xb0] sm:$0xff]
        %v248 = vld [vmem:[%s189 + $0xb8] sm:$0xff]
        %v249 = vld [vmem:[%s189 + $0xc0] sm:$0xff]
        %v250 = vld [vmem:[%s189 + $0xc8] sm:$0xff]
        %v251 = vld [vmem:[%s189 + $0xd0] sm:$0xff]
        %v252 = vld [vmem:[%s189 + $0xd8] sm:$0xff]
        %v253 = vld [vmem:[%s189 + $0xe0] sm:$0xff]
        %v254 = vld [vmem:[%s189 + $0xe8] sm:$0xff]
        %v255 = vld [vmem:[%s189 + $0xf0] sm:$0xff]
        %v256 = vld [vmem:[%s189 + $0xf8] sm:$0xff]
        %v257 = vld [vmem:[%s189 + $0x100] sm:$0xff]
        %v258 = vld [vmem:[%s189 + $0x108] sm:$0xff]
        %v259 = vld [vmem:[%s189 + $0x110] sm:$0xff]
        %v260 = vld [vmem:[%s189 + $0x118] sm:$0xff]
        %v261 = vld [vmem:[%s189 + $0x120] sm:$0xff]
        %v262 = vld [vmem:[%s189 + $0x128] sm:$0xff]
        %v263 = vld [vmem:[%s189 + $0x130] sm:$0xff]
        %v264 = vld [vmem:[%s189 + $0x138] sm:$0xff]
        %v265 = vld [vmem:[%s189 + $0x140] sm:$0xff]
        %v266 = vld [vmem:[%s189 + $0x148] sm:$0xff]
        %v267 = vld [vmem:[%s189 + $0x150] sm:$0xff]
        %v268 = vld [vmem:[%s189 + $0x158] sm:$0xff]
        %v269 = vld [vmem:[%s189 + $0x160] sm:$0xff]
        %v270 = vld [vmem:[%s189 + $0x168] sm:$0xff]
        %v271 = vld [vmem:[%s189 + $0x170] sm:$0xff]
        %v272 = vld [vmem:[%s189 + $0x178] sm:$0xff]
        %v273 = vld [vmem:[#allocation5] sm:$0xff]
        %v274 = vld [vmem:[#allocation5 + $0x8] sm:$0xff]
        %v275 = vld [vmem:[#allocation5 + $0x10] sm:$0xff]
        %v276 = vld [vmem:[#allocation5 + $0x18] sm:$0xff]
        %v277 = vld [vmem:[#allocation5 + $0x20] sm:$0xff]
        %v278 = vld [vmem:[#allocation5 + $0x28] sm:$0xff]
        %v279 = vld [vmem:[#allocation5 + $0x30] sm:$0xff]
        %v280 = vld [vmem:[#allocation5 + $0x38] sm:$0xff]
        %v281 = vld [vmem:[#allocation5 + $0x40] sm:$0xff]
        %v282 = vld [vmem:[#allocation5 + $0x48] sm:$0xff]
        %v283 = vld [vmem:[#allocation5 + $0x50] sm:$0xff]
        %v284 = vld [vmem:[#allocation5 + $0x58] sm:$0xff]
        %v285 = vld [vmem:[#allocation5 + $0x60] sm:$0xff]
        %v286 = vld [vmem:[#allocation5 + $0x68] sm:$0xff]
        %v287 = vld [vmem:[#allocation5 + $0x70] sm:$0xff]
        %v288 = vld [vmem:[#allocation5 + $0x78] sm:$0xff]
        %v289 = vld [vmem:[#allocation5 + $0x80] sm:$0xff]
        %v290 = vld [vmem:[#allocation5 + $0x88] sm:$0xff]
        %v291 = vld [vmem:[#allocation5 + $0x90] sm:$0xff]
        %v292 = vld [vmem:[#allocation5 + $0x98] sm:$0xff]
        %v293 = vld [vmem:[#allocation5 + $0xa0] sm:$0xff]
        %v294 = vld [vmem:[#allocation5 + $0xa8] sm:$0xff]
        %v295 = vld [vmem:[#allocation5 + $0xb0] sm:$0xff]
        %v296 = vld [vmem:[#allocation5 + $0xb8] sm:$0xff]
        %v297 = vld [vmem:[#allocation5 + $0xc0] sm:$0xff]
        %v298 = vld [vmem:[#allocation5 + $0xc8] sm:$0xff]
        %v299 = vld [vmem:[#allocation5 + $0xd0] sm:$0xff]
        %v300 = vld [vmem:[#allocation5 + $0xd8] sm:$0xff]
        %v301 = vld [vmem:[#allocation5 + $0xe0] sm:$0xff]
        %v302 = vld [vmem:[#allocation5 + $0xe8] sm:$0xff]
        %v303 = vld [vmem:[#allocation5 + $0xf0] sm:$0xff]
        %v304 = vld [vmem:[#allocation5 + $0xf8] sm:$0xff]
        %v305 = vld [vmem:[#allocation5 + $0x100] sm:$0xff]
        %v306 = vld [vmem:[#allocation5 + $0x108] sm:$0xff]
        %v307 = vld [vmem:[#allocation5 + $0x110] sm:$0xff]
        %v308 = vld [vmem:[#allocation5 + $0x118] sm:$0xff]
        %v309 = vld [vmem:[#allocation5 + $0x120] sm:$0xff]
        %v310 = vld [vmem:[#allocation5 + $0x128] sm:$0xff]
        %v311 = vld [vmem:[#allocation5 + $0x130] sm:$0xff]
        %v312 = vld [vmem:[#allocation5 + $0x138] sm:$0xff]
        %v313 = vld [vmem:[#allocation5 + $0x140] sm:$0xff]
        %v314 = vld [vmem:[#allocation5 + $0x148] sm:$0xff]
        %v315 = vld [vmem:[#allocation5 + $0x150] sm:$0xff]
        %v316 = vld [vmem:[#allocation5 + $0x158] sm:$0xff]
        %v317 = vld [vmem:[#allocation5 + $0x160] sm:$0xff]
        %v318 = vld [vmem:[#allocation5 + $0x168] sm:$0xff]
        %v319 = vld [vmem:[#allocation5 + $0x170] sm:$0xff]
        %v320 = vld [vmem:[#allocation5 + $0x178] sm:$0xff]
        %v321 = vld [vmem:[#allocation5 + $0x180] sm:$0xff]
        %v322 = vld [vmem:[#allocation5 + $0x188] sm:$0xff]
        %v323 = vld [vmem:[#allocation5 + $0x190] sm:$0xff]
        %v324 = vld [vmem:[#allocation5 + $0x198] sm:$0xff]
        %v325 = vld [vmem:[#allocation5 + $0x1a0] sm:$0xff]
        %v326 = vld [vmem:[#allocation5 + $0x1a8] sm:$0xff]
        %v327 = vld [vmem:[#allocation5 + $0x1b0] sm:$0xff]
        %v328 = vld [vmem:[#allocation5 + $0x1b8] sm:$0xff]
        %v329 = vld [vmem:[#allocation5 + $0x1c0] sm:$0xff]
        %v330 = vld [vmem:[#allocation5 + $0x1c8] sm:$0xff]
        %v331 = vld [vmem:[#allocation5 + $0x1d0] sm:$0xff]
        %v332 = vld [vmem:[#allocation5 + $0x1d8] sm:$0xff]
        %v333 = vld [vmem:[#allocation5 + $0x1e0] sm:$0xff]
        %v334 = vld [vmem:[#allocation5 + $0x1e8] sm:$0xff]
        %v335 = vld [vmem:[#allocation5 + $0x1f0] sm:$0xff]
        %v336 = vld [vmem:[#allocation5 + $0x1f8] sm:$0xff]
        %v337 = vld [vmem:[#allocation7] sm:$0x3]
        %v339 = vperm.slane %v337, 0
        %v340 = vperm.slane %v337, 1
        %343 = vmatpush.xpose.msra.mxu0 %v303
        %344 = vmatpush.xpose.msra.mxu0 %v301
        %345 = vmatpush.xpose.msra.mxu0 %v299
        %346 = vmatpush.xpose.msra.mxu0 %v297
        %347 = vmatpush.xpose.msra.mxu0 %v295
        %348 = vmatpush.xpose.msra.mxu0 %v293
        %349 = vmatpush.xpose.msra.mxu0 %v291
        %350 = vmatpush.xpose.msra.mxu0 %v289
        %351 = vmatpush.xpose.msra.mxu0 %v287
        %352 = vmatpush.xpose.msra.mxu0 %v285
        %353 = vmatpush.xpose.msra.mxu0 %v283
        %354 = vmatpush.xpose.msra.mxu0 %v281
        %355 = vmatpush.xpose.msra.mxu0 %v279
        %356 = vmatpush.xpose.msra.mxu0 %v277
        %357 = vmatpush.xpose.msra.mxu0 %v275
        %358 = vmatpush.xpose.msra.mxu0 %v273
        %359 = vmatmul.f32.gmra.mxu0 %v225
        %v360 = vpop.f32.mrf.mxu0
        %v361 = vadd.f32 %v339, %v360
        %362 = vmatmul.f32.gmra.mxu0 %v227
        %v363 = vpop.f32.mrf.mxu0
        %v364 = vadd.f32 %v339, %v363
        %365 = vmatmul.f32.gmra.mxu0 %v229
        %v366 = vpop.f32.mrf.mxu0
        %v367 = vadd.f32 %v339, %v366
        %368 = vmatmul.f32.gmra.mxu0 %v231
        %v369 = vpop.f32.mrf.mxu0
        %v370 = vadd.f32 %v339, %v369
        %371 = vmatmul.f32.gmra.mxu0 %v233
        %v372 = vpop.f32.mrf.mxu0
        %v373 = vadd.f32 %v339, %v372
        %374 = vmatmul.f32.gmra.mxu0 %v235
        %v375 = vpop.f32.mrf.mxu0
        %v376 = vadd.f32 %v339, %v375
        %377 = vmatmul.f32.gmra.mxu0 %v237
        %v378 = vpop.f32.mrf.mxu0
        %v379 = vadd.f32 %v339, %v378
        %380 = vmatmul.f32.gmra.mxu0 %v239
        %v381 = vpop.f32.mrf.mxu0
        %v382 = vadd.f32 %v339, %v381
        %383 = vmatmul.f32.gmra.mxu0 %v241
        %v384 = vpop.f32.mrf.mxu0
        %v385 = vadd.f32 %v339, %v384
        %386 = vmatmul.f32.gmra.mxu0 %v243
        %v387 = vpop.f32.mrf.mxu0
        %v388 = vadd.f32 %v339, %v387
        %389 = vmatmul.f32.gmra.mxu0 %v245
        %v390 = vpop.f32.mrf.mxu0
        %v391 = vadd.f32 %v339, %v390
        %392 = vmatmul.f32.gmra.mxu0 %v247
        %v393 = vpop.f32.mrf.mxu0
        %v394 = vadd.f32 %v339, %v393
        %395 = vmatmul.f32.gmra.mxu0 %v249
        %v396 = vpop.f32.mrf.mxu0
        %v397 = vadd.f32 %v339, %v396
        %398 = vmatmul.f32.gmra.mxu0 %v251
        %v399 = vpop.f32.mrf.mxu0
        %v400 = vadd.f32 %v339, %v399
        %401 = vmatmul.f32.gmra.mxu0 %v253
        %v402 = vpop.f32.mrf.mxu0
        %v403 = vadd.f32 %v339, %v402
        %404 = vmatmul.f32.gmra.mxu0 %v255
        %v405 = vpop.f32.mrf.mxu0
        %v406 = vadd.f32 %v339, %v405
        %407 = vmatmul.f32.gmra.mxu0 %v257
        %v408 = vpop.f32.mrf.mxu0
        %v409 = vadd.f32 %v339, %v408
        %410 = vmatmul.f32.gmra.mxu0 %v259
        %v411 = vpop.f32.mrf.mxu0
        %v412 = vadd.f32 %v339, %v411
        %413 = vmatmul.f32.gmra.mxu0 %v261
        %v414 = vpop.f32.mrf.mxu0
        %v415 = vadd.f32 %v339, %v414
        %416 = vmatmul.f32.gmra.mxu0 %v263
        %v417 = vpop.f32.mrf.mxu0
        %v418 = vadd.f32 %v339, %v417
        %419 = vmatmul.f32.gmra.mxu0 %v265
        %v420 = vpop.f32.mrf.mxu0
        %v421 = vadd.f32 %v339, %v420
        %422 = vmatmul.f32.gmra.mxu0 %v267
        %v423 = vpop.f32.mrf.mxu0
        %v424 = vadd.f32 %v339, %v423
        %425 = vmatmul.f32.gmra.mxu0 %v269
        %v426 = vpop.f32.mrf.mxu0
        %v427 = vadd.f32 %v339, %v426
        %428 = vmatmul.f32.gmra.mxu0 %v271
        %v429 = vpop.f32.mrf.mxu0
        %v430 = vadd.f32 %v339, %v429
        %431 = vdwg.mxu0
        %432 = vmatpush.xpose.msra.mxu0 %v304
        %433 = vmatpush.xpose.msra.mxu0 %v302
        %434 = vmatpush.xpose.msra.mxu0 %v300
        %435 = vmatpush.xpose.msra.mxu0 %v298
        %436 = vmatpush.xpose.msra.mxu0 %v296
        %437 = vmatpush.xpose.msra.mxu0 %v294
        %438 = vmatpush.xpose.msra.mxu0 %v292
        %439 = vmatpush.xpose.msra.mxu0 %v290
        %440 = vmatpush.xpose.msra.mxu0 %v288
        %441 = vmatpush.xpose.msra.mxu0 %v286
        %442 = vmatpush.xpose.msra.mxu0 %v284
        %443 = vmatpush.xpose.msra.mxu0 %v282
        %444 = vmatpush.xpose.msra.mxu0 %v280
        %445 = vmatpush.xpose.msra.mxu0 %v278
        %446 = vmatpush.xpose.msra.mxu0 %v276
        %447 = vmatpush.xpose.msra.mxu0 %v274
        %448 = vmatmul.f32.gmra.mxu0 %v226
        %v449 = vpop.f32.mrf.mxu0
        %v450 = vadd.f32 %v361, %v449
        %451 = vmatmul.f32.gmra.mxu0 %v228
        %v452 = vpop.f32.mrf.mxu0
        %v453 = vadd.f32 %v364, %v452
        %454 = vmatmul.f32.gmra.mxu0 %v230
        %v455 = vpop.f32.mrf.mxu0
        %v456 = vadd.f32 %v367, %v455
        %457 = vmatmul.f32.gmra.mxu0 %v232
        %v458 = vpop.f32.mrf.mxu0
        %v459 = vadd.f32 %v370, %v458
        %460 = vmatmul.f32.gmra.mxu0 %v234
        %v461 = vpop.f32.mrf.mxu0
        %v462 = vadd.f32 %v373, %v461
        %463 = vmatmul.f32.gmra.mxu0 %v236
        %v464 = vpop.f32.mrf.mxu0
        %v465 = vadd.f32 %v376, %v464
        %466 = vmatmul.f32.gmra.mxu0 %v238
        %v467 = vpop.f32.mrf.mxu0
        %v468 = vadd.f32 %v379, %v467
        %469 = vmatmul.f32.gmra.mxu0 %v240
        %v470 = vpop.f32.mrf.mxu0
        %v471 = vadd.f32 %v382, %v470
        %472 = vmatmul.f32.gmra.mxu0 %v242
        %v473 = vpop.f32.mrf.mxu0
        %v474 = vadd.f32 %v385, %v473
        %475 = vmatmul.f32.gmra.mxu0 %v244
        %v476 = vpop.f32.mrf.mxu0
        %v477 = vadd.f32 %v388, %v476
        %478 = vmatmul.f32.gmra.mxu0 %v246
        %v479 = vpop.f32.mrf.mxu0
        %v480 = vadd.f32 %v391, %v479
        %481 = vmatmul.f32.gmra.mxu0 %v248
        %v482 = vpop.f32.mrf.mxu0
        %v483 = vadd.f32 %v394, %v482
        %484 = vmatmul.f32.gmra.mxu0 %v250
        %v485 = vpop.f32.mrf.mxu0
        %v486 = vadd.f32 %v397, %v485
        %487 = vmatmul.f32.gmra.mxu0 %v252
        %v488 = vpop.f32.mrf.mxu0
        %v489 = vadd.f32 %v400, %v488
        %490 = vmatmul.f32.gmra.mxu0 %v254
        %v491 = vpop.f32.mrf.mxu0
        %v492 = vadd.f32 %v403, %v491
        %493 = vmatmul.f32.gmra.mxu0 %v256
        %v494 = vpop.f32.mrf.mxu0
        %v495 = vadd.f32 %v406, %v494
        %496 = vmatmul.f32.gmra.mxu0 %v258
        %v497 = vpop.f32.mrf.mxu0
        %v498 = vadd.f32 %v409, %v497
        %499 = vmatmul.f32.gmra.mxu0 %v260
        %v500 = vpop.f32.mrf.mxu0
        %v501 = vadd.f32 %v412, %v500
        %502 = vmatmul.f32.gmra.mxu0 %v262
        %v503 = vpop.f32.mrf.mxu0
        %v504 = vadd.f32 %v415, %v503
        %505 = vmatmul.f32.gmra.mxu0 %v264
        %v506 = vpop.f32.mrf.mxu0
        %v507 = vadd.f32 %v418, %v506
        %508 = vmatmul.f32.gmra.mxu0 %v266
        %v509 = vpop.f32.mrf.mxu0
        %v510 = vadd.f32 %v421, %v509
        %511 = vmatmul.f32.gmra.mxu0 %v268
        %v512 = vpop.f32.mrf.mxu0
        %v513 = vadd.f32 %v424, %v512
        %514 = vmatmul.f32.gmra.mxu0 %v270
        %v515 = vpop.f32.mrf.mxu0
        %v516 = vadd.f32 %v427, %v515
        %517 = vmatmul.f32.gmra.mxu0 %v272
        %v518 = vpop.f32.mrf.mxu0
        %v519 = vadd.f32 %v430, %v518
        %520 = vdwg.mxu0
        %521 = vmatpush.xpose.msra.mxu0 %v335
        %522 = vmatpush.xpose.msra.mxu0 %v333
        %523 = vmatpush.xpose.msra.mxu0 %v331
        %524 = vmatpush.xpose.msra.mxu0 %v329
        %525 = vmatpush.xpose.msra.mxu0 %v327
        %526 = vmatpush.xpose.msra.mxu0 %v325
        %527 = vmatpush.xpose.msra.mxu0 %v323
        %528 = vmatpush.xpose.msra.mxu0 %v321
        %529 = vmatpush.xpose.msra.mxu0 %v319
        %530 = vmatpush.xpose.msra.mxu0 %v317
        %531 = vmatpush.xpose.msra.mxu0 %v315
        %532 = vmatpush.xpose.msra.mxu0 %v313
        %533 = vmatpush.xpose.msra.mxu0 %v311
        %534 = vmatpush.xpose.msra.mxu0 %v309
        %535 = vmatpush.xpose.msra.mxu0 %v307
        %536 = vmatpush.xpose.msra.mxu0 %v305
        %537 = vmatmul.f32.gmra.mxu0 %v225
        %v538 = vpop.f32.mrf.mxu0
        %v539 = vadd.f32 %v340, %v538
        %540 = vmatmul.f32.gmra.mxu0 %v227
        %v541 = vpop.f32.mrf.mxu0
        %v542 = vadd.f32 %v340, %v541
        %543 = vmatmul.f32.gmra.mxu0 %v229
        %v544 = vpop.f32.mrf.mxu0
        %v545 = vadd.f32 %v340, %v544
        %546 = vmatmul.f32.gmra.mxu0 %v231
        %v547 = vpop.f32.mrf.mxu0
        %v548 = vadd.f32 %v340, %v547
        %549 = vmatmul.f32.gmra.mxu0 %v233
        %v550 = vpop.f32.mrf.mxu0
        %v551 = vadd.f32 %v340, %v550
        %552 = vmatmul.f32.gmra.mxu0 %v235
        %v553 = vpop.f32.mrf.mxu0
        %v554 = vadd.f32 %v340, %v553
        %555 = vmatmul.f32.gmra.mxu0 %v237
        %v556 = vpop.f32.mrf.mxu0
        %v557 = vadd.f32 %v340, %v556
        %558 = vmatmul.f32.gmra.mxu0 %v239
        %v559 = vpop.f32.mrf.mxu0
        %v560 = vadd.f32 %v340, %v559
        %561 = vmatmul.f32.gmra.mxu0 %v241
        %v562 = vpop.f32.mrf.mxu0
        %v563 = vadd.f32 %v340, %v562
        %564 = vmatmul.f32.gmra.mxu0 %v243
        %v565 = vpop.f32.mrf.mxu0
        %v566 = vadd.f32 %v340, %v565
        %567 = vmatmul.f32.gmra.mxu0 %v245
        %v568 = vpop.f32.mrf.mxu0
        %v569 = vadd.f32 %v340, %v568
        %570 = vmatmul.f32.gmra.mxu0 %v247
        %v571 = vpop.f32.mrf.mxu0
        %v572 = vadd.f32 %v340, %v571
        %573 = vmatmul.f32.gmra.mxu0 %v249
        %v574 = vpop.f32.mrf.mxu0
        %v575 = vadd.f32 %v340, %v574
        %576 = vmatmul.f32.gmra.mxu0 %v251
        %v577 = vpop.f32.mrf.mxu0
        %v578 = vadd.f32 %v340, %v577
        %579 = vmatmul.f32.gmra.mxu0 %v253
        %v580 = vpop.f32.mrf.mxu0
        %v581 = vadd.f32 %v340, %v580
        %582 = vmatmul.f32.gmra.mxu0 %v255
        %v583 = vpop.f32.mrf.mxu0
        %v584 = vadd.f32 %v340, %v583
        %585 = vmatmul.f32.gmra.mxu0 %v257
        %v586 = vpop.f32.mrf.mxu0
        %v587 = vadd.f32 %v340, %v586
        %588 = vmatmul.f32.gmra.mxu0 %v259
        %v589 = vpop.f32.mrf.mxu0
        %v590 = vadd.f32 %v340, %v589
        %591 = vmatmul.f32.gmra.mxu0 %v261
        %v592 = vpop.f32.mrf.mxu0
        %v593 = vadd.f32 %v340, %v592
        %594 = vmatmul.f32.gmra.mxu0 %v263
        %v595 = vpop.f32.mrf.mxu0
        %v596 = vadd.f32 %v340, %v595
        %597 = vmatmul.f32.gmra.mxu0 %v265
        %v598 = vpop.f32.mrf.mxu0
        %v599 = vadd.f32 %v340, %v598
        %600 = vmatmul.f32.gmra.mxu0 %v267
        %v601 = vpop.f32.mrf.mxu0
        %v602 = vadd.f32 %v340, %v601
        %603 = vmatmul.f32.gmra.mxu0 %v269
        %v604 = vpop.f32.mrf.mxu0
        %v605 = vadd.f32 %v340, %v604
        %606 = vmatmul.f32.gmra.mxu0 %v271
        %v607 = vpop.f32.mrf.mxu0
        %v608 = vadd.f32 %v340, %v607
        %609 = vdwg.mxu0
        %610 = vmatpush.xpose.msra.mxu0 %v336
        %611 = vmatpush.xpose.msra.mxu0 %v334
        %612 = vmatpush.xpose.msra.mxu0 %v332
        %613 = vmatpush.xpose.msra.mxu0 %v330
        %614 = vmatpush.xpose.msra.mxu0 %v328
        %615 = vmatpush.xpose.msra.mxu0 %v326
        %616 = vmatpush.xpose.msra.mxu0 %v324
        %617 = vmatpush.xpose.msra.mxu0 %v322
        %618 = vmatpush.xpose.msra.mxu0 %v320
        %619 = vmatpush.xpose.msra.mxu0 %v318
        %620 = vmatpush.xpose.msra.mxu0 %v316
        %621 = vmatpush.xpose.msra.mxu0 %v314
        %622 = vmatpush.xpose.msra.mxu0 %v312
        %623 = vmatpush.xpose.msra.mxu0 %v310
        %624 = vmatpush.xpose.msra.mxu0 %v308
        %625 = vmatpush.xpose.msra.mxu0 %v306
        %626 = vmatmul.f32.gmra.mxu0 %v226
        %v627 = vpop.f32.mrf.mxu0
        %v628 = vadd.f32 %v539, %v627
        %629 = vmatmul.f32.gmra.mxu0 %v228
        %v630 = vpop.f32.mrf.mxu0
        %v631 = vadd.f32 %v542, %v630
        %632 = vmatmul.f32.gmra.mxu0 %v230
        %v633 = vpop.f32.mrf.mxu0
        %v634 = vadd.f32 %v545, %v633
        %635 = vmatmul.f32.gmra.mxu0 %v232
        %v636 = vpop.f32.mrf.mxu0
        %v637 = vadd.f32 %v548, %v636
        %638 = vmatmul.f32.gmra.mxu0 %v234
        %v639 = vpop.f32.mrf.mxu0
        %v640 = vadd.f32 %v551, %v639
        %641 = vmatmul.f32.gmra.mxu0 %v236
        %v642 = vpop.f32.mrf.mxu0
        %v643 = vadd.f32 %v554, %v642
        %644 = vmatmul.f32.gmra.mxu0 %v238
        %v645 = vpop.f32.mrf.mxu0
        %v646 = vadd.f32 %v557, %v645
        %647 = vmatmul.f32.gmra.mxu0 %v240
        %v648 = vpop.f32.mrf.mxu0
        %v649 = vadd.f32 %v560, %v648
        %650 = vmatmul.f32.gmra.mxu0 %v242
        %v651 = vpop.f32.mrf.mxu0
        %v652 = vadd.f32 %v563, %v651
        %653 = vmatmul.f32.gmra.mxu0 %v244
        %v654 = vpop.f32.mrf.mxu0
        %v655 = vadd.f32 %v566, %v654
        %656 = vmatmul.f32.gmra.mxu0 %v246
        %v657 = vpop.f32.mrf.mxu0
        %v658 = vadd.f32 %v569, %v657
        %659 = vmatmul.f32.gmra.mxu0 %v248
        %v660 = vpop.f32.mrf.mxu0
        %v661 = vadd.f32 %v572, %v660
        %662 = vmatmul.f32.gmra.mxu0 %v250
        %v663 = vpop.f32.mrf.mxu0
        %v664 = vadd.f32 %v575, %v663
        %665 = vmatmul.f32.gmra.mxu0 %v252
        %v666 = vpop.f32.mrf.mxu0
        %v667 = vadd.f32 %v578, %v666
        %668 = vmatmul.f32.gmra.mxu0 %v254
        %v669 = vpop.f32.mrf.mxu0
        %v670 = vadd.f32 %v581, %v669
        %671 = vmatmul.f32.gmra.mxu0 %v256
        %v672 = vpop.f32.mrf.mxu0
        %v673 = vadd.f32 %v584, %v672
        %674 = vmatmul.f32.gmra.mxu0 %v258
        %v675 = vpop.f32.mrf.mxu0
        %v676 = vadd.f32 %v587, %v675
        %677 = vmatmul.f32.gmra.mxu0 %v260
        %v678 = vpop.f32.mrf.mxu0
        %v679 = vadd.f32 %v590, %v678
        %680 = vmatmul.f32.gmra.mxu0 %v262
        %v681 = vpop.f32.mrf.mxu0
        %v682 = vadd.f32 %v593, %v681
        %683 = vmatmul.f32.gmra.mxu0 %v264
        %v684 = vpop.f32.mrf.mxu0
        %v685 = vadd.f32 %v596, %v684
        %686 = vmatmul.f32.gmra.mxu0 %v266
        %v687 = vpop.f32.mrf.mxu0
        %v688 = vadd.f32 %v599, %v687
        %689 = vmatmul.f32.gmra.mxu0 %v268
        %v690 = vpop.f32.mrf.mxu0
        %v691 = vadd.f32 %v602, %v690
        %692 = vmatmul.f32.gmra.mxu0 %v270
        %v693 = vpop.f32.mrf.mxu0
        %v694 = vadd.f32 %v605, %v693
        %695 = vmatmul.f32.gmra.mxu0 %v272
        %v696 = vpop.f32.mrf.mxu0
        %v697 = vadd.f32 %v608, %v696
        %698 = vdwg.mxu0
        %699 = vst [vmem:[%s222] sm:$0xff] %v450
        %700 = vst [vmem:[%s222 + $0x8] sm:$0xff] %v628
        %701 = vst [vmem:[%s222 + $0x10] sm:$0xff] %v453
        %702 = vst [vmem:[%s222 + $0x18] sm:$0xff] %v631
        %703 = vst [vmem:[%s222 + $0x20] sm:$0xff] %v456
        %704 = vst [vmem:[%s222 + $0x28] sm:$0xff] %v634
        %705 = vst [vmem:[%s222 + $0x30] sm:$0xff] %v459
        %706 = vst [vmem:[%s222 + $0x38] sm:$0xff] %v637
        %707 = vst [vmem:[%s222 + $0x40] sm:$0xff] %v462
        %708 = vst [vmem:[%s222 + $0x48] sm:$0xff] %v640
        %709 = vst [vmem:[%s222 + $0x50] sm:$0xff] %v465
        %710 = vst [vmem:[%s222 + $0x58] sm:$0xff] %v643
        %711 = vst [vmem:[%s222 + $0x60] sm:$0xff] %v468
        %712 = vst [vmem:[%s222 + $0x68] sm:$0xff] %v646
        %713 = vst [vmem:[%s222 + $0x70] sm:$0xff] %v471
        %714 = vst [vmem:[%s222 + $0x78] sm:$0xff] %v649
        %715 = vst [vmem:[%s222 + $0x80] sm:$0xff] %v474
        %716 = vst [vmem:[%s222 + $0x88] sm:$0xff] %v652
        %717 = vst [vmem:[%s222 + $0x90] sm:$0xff] %v477
        %718 = vst [vmem:[%s222 + $0x98] sm:$0xff] %v655
        %719 = vst [vmem:[%s222 + $0xa0] sm:$0xff] %v480
        %720 = vst [vmem:[%s222 + $0xa8] sm:$0xff] %v658
        %721 = vst [vmem:[%s222 + $0xb0] sm:$0xff] %v483
        %722 = vst [vmem:[%s222 + $0xb8] sm:$0xff] %v661
        %723 = vst [vmem:[%s222 + $0xc0] sm:$0xff] %v486
        %724 = vst [vmem:[%s222 + $0xc8] sm:$0xff] %v664
        %725 = vst [vmem:[%s222 + $0xd0] sm:$0xff] %v489
        %726 = vst [vmem:[%s222 + $0xd8] sm:$0xff] %v667
        %727 = vst [vmem:[%s222 + $0xe0] sm:$0xff] %v492
        %728 = vst [vmem:[%s222 + $0xe8] sm:$0xff] %v670
        %729 = vst [vmem:[%s222 + $0xf0] sm:$0xff] %v495
        %730 = vst [vmem:[%s222 + $0xf8] sm:$0xff] %v673
        %731 = vst [vmem:[%s222 + $0x100] sm:$0xff] %v498
        %732 = vst [vmem:[%s222 + $0x108] sm:$0xff] %v676
        %733 = vst [vmem:[%s222 + $0x110] sm:$0xff] %v501
        %734 = vst [vmem:[%s222 + $0x118] sm:$0xff] %v679
        %735 = vst [vmem:[%s222 + $0x120] sm:$0xff] %v504
        %736 = vst [vmem:[%s222 + $0x128] sm:$0xff] %v682
        %737 = vst [vmem:[%s222 + $0x130] sm:$0xff] %v507
        %738 = vst [vmem:[%s222 + $0x138] sm:$0xff] %v685
        %739 = vst [vmem:[%s222 + $0x140] sm:$0xff] %v510
        %740 = vst [vmem:[%s222 + $0x148] sm:$0xff] %v688
        %741 = vst [vmem:[%s222 + $0x150] sm:$0xff] %v513
        %742 = vst [vmem:[%s222 + $0x158] sm:$0xff] %v691
        %743 = vst [vmem:[%s222 + $0x160] sm:$0xff] %v516
        %744 = vst [vmem:[%s222 + $0x168] sm:$0xff] %v694
        %745 = vst [vmem:[%s222 + $0x170] sm:$0xff] %v519
        %746 = vst [vmem:[%s222 + $0x178] sm:$0xff] %v697
        %s747 = sand.u32 %s97, 1
        %s748 = scalar_lea.sflag [#allocation4], %s747
        %s749 = sand.u32 %s97, 1
        %s750 = smul.addr %s749, 384
        %s751 = scalar_lea.vmem [#allocation8], %s750
        // Predicated region
        $region45: #{tpu_custom_call.1} parent=31 // pred_check
          %p752 = pneg %p107
        $region46: #{tpu_custom_call.1} parent=31 // pred_check_branch
          %754 = sbr.rel (%p752) target = $region48
        $region47: #{tpu_custom_call.1} parent=31 // pred_region
          %s755 = smul.u32 24, %s21
          %757 = vsyncadd %s748, 0
          %s758 = smul.addr %s755, 2
          %s759 = smul.addr %s758, 8
          %s760 = scalar_lea.hbm %s3, %s759
          %s761 = sshll.u32 %s751, 4
          %s762 = int_to_ptr.vmem [resolvable:$true] %s761
          %s763 = sshll.u32 %s760, 4
          %s764 = int_to_ptr.hbm [resolvable:$true] %s763
          %769 = dma.vmem_to_hbm [thread:$0]  %s762, 6144, %s764, %s748, 256, 256, 16
        $region48: #{tpu_custom_call.1} parent=31 // pred_fallthru
          _
      $region32: #{tpu_custom_call.1} parent=5 // pred_fallthru
        _
      %p770 = scmp.le.s32.totalorder 2, %s16
      // Predicated region
      $region49: #{tpu_custom_call.1} parent=5 // pred_check
        %p771 = pneg %p770
      $region50: #{tpu_custom_call.1} parent=5 // pred_check_branch
        %773 = sbr.rel (%p771) target = $region52
      $region51: #{tpu_custom_call.1} parent=5 // pred_region
        %s774 = ssub.s32 %s16, 2
        // Predicated region
        $region53: #{tpu_custom_call.1} parent=51 // pred_check
          %p775 = pneg %p113
        $region54: #{tpu_custom_call.1} parent=51 // pred_check_branch
          %777 = sbr.rel (%p775) target = $region56
        $region55: #{tpu_custom_call.1} parent=51 // pred_region
          %s778 = sand.u32 %s98, 1
          %s779 = scalar_lea.sflag [#allocation4], %s778
          %s780 = sand.u32 %s98, 1
          %s781 = smul.addr %s780, 384
          %s782 = scalar_lea.vmem [#allocation8], %s781
          %784 = dma.done %s779, 6144
        $region56: #{tpu_custom_call.1} parent=51 // pred_fallthru
          _
      $region52: #{tpu_custom_call.1} parent=5 // pred_fallthru
        _
    $region6: #{tpu_custom_call.1} parent=1 // loop_footer
      %s20 = sadd.s32 1, %s16
    $region7: #{tpu_custom_call.1} parent=1 // loop_footer_branch
      %15 = sbr.rel target = $region3
    $region8: #{tpu_custom_call.1} parent=1 // loop_exit
      _
    %785 = vsyncpa [#allocation3], 1
    %s786 = scalar_lea.sflag [#allocation3], 1
    %787 = vsyncpa %s786, 1
    %788 = vsyncpa [#allocation6], 1
    %789 = vsyncpa [#allocation4], 1
    %s790 = scalar_lea.sflag [#allocation4], 1
    %791 = vsyncpa %s790, 1

</llo_original>
